<compile_context>
chip_gen: v7x
topology: tpu7x:2x2x1
jax: 0.10.0
libtpu: 0.0.40
codegen_flags: <defaults>
</compile_context>

<pallas_src>
import functools

import jax
import jax.numpy as jnp
from jax.experimental import pallas as pl
from jax.experimental.pallas import tpu as pltpu


def sdfnet_kernel(x_ref, w1_ref, b1_ref, w2_ref, b2_ref, o_ref):
    # Layer 1: MXU matmul (bf16 operands, f32 accumulation), bias + ReLU on VPU in f32.
    h = jnp.dot(x_ref[...], w1_ref[...], preferred_element_type=jnp.float32)
    h = jnp.maximum(h + b1_ref[...], 0.0)
    # Layer 2: cast hidden activations back to the MXU dtype, accumulate in f32.
    h = h.astype(w2_ref.dtype)
    o = jnp.dot(h, w2_ref[...], preferred_element_type=jnp.float32)
    o = jnp.maximum(o + b2_ref[...], 0.0)
    o_ref[...] = o.astype(o_ref.dtype)


def _round_up(x, m):
    return ((x + m - 1) // m) * m


def sdfnet_forward(sdf, w1, b1, w2, b2, *, tm=None, use_bf16=True):
    """sdf: (N, sdf_in); w1: (sdf_in, 128); b1: (1, 128);
       w2: (128, sdf_out); b2: (1, sdf_out) -> (N, sdf_out)."""
    N, sdf_in = sdf.shape
    hidden = w1.shape[1]
    sdf_out = w2.shape[1]
    out_dtype = sdf.dtype

    # --- Lane-dense output: pad output features up to a multiple of 128. ---
    out_pad = _round_up(sdf_out, 128)
    if out_pad != sdf_out:
        w2 = jnp.pad(w2, ((0, 0), (0, out_pad - sdf_out)))
        b2 = jnp.pad(b2, ((0, 0), (0, out_pad - sdf_out)))

    # --- Row tile: large to amortize per-grid-step overhead; keep >= 2 steps
    #     when N allows so v7x's 2 TensorCores are both used. ---
    if tm is None:
        if N <= 1024:
            tm = max(8, _round_up(pl.cdiv(N, 2), 8))
        else:
            tm = 512
    tm = min(tm, _round_up(N, 8))

    n_pad = _round_up(N, tm)
    if n_pad != N:
        sdf = jnp.pad(sdf, ((0, n_pad - N), (0, 0)))
    grid = (n_pad // tm,)

    # --- dtype plumbing: bf16 MXU operands, f32 biases/accumulation. ---
    mxu_dtype = jnp.bfloat16 if use_bf16 else out_dtype
    x = sdf.astype(mxu_dtype)
    w1c = w1.astype(mxu_dtype)
    w2c = w2.astype(mxu_dtype)
    b1c = b1.astype(jnp.float32)
    b2c = b2.astype(jnp.float32)

    bytes_accessed = (
        x.size * x.dtype.itemsize
        + w1c.size * w1c.dtype.itemsize
        + w2c.size * w2c.dtype.itemsize
        + b1c.size * b1c.dtype.itemsize
        + b2c.size * b2c.dtype.itemsize
        + n_pad * out_pad * jnp.dtype(out_dtype).itemsize
    )
    cost = pl.CostEstimate(
        flops=2 * n_pad * (sdf_in * hidden + hidden * out_pad),
        transcendentals=0,
        bytes_accessed=bytes_accessed,
    )

    out = pl.pallas_call(
        sdfnet_kernel,
        out_shape=jax.ShapeDtypeStruct((n_pad, out_pad), out_dtype),
        grid_spec=pltpu.PrefetchScalarGridSpec(
            num_scalar_prefetch=0,
            grid=grid,
            in_specs=[
                pl.BlockSpec((tm, sdf_in), lambda i: (i, 0)),        # x row-tile
                pl.BlockSpec((sdf_in, hidden), lambda i: (0, 0)),    # W1 (resident)
                pl.BlockSpec((1, hidden), lambda i: (0, 0)),         # b1 (resident)
                pl.BlockSpec((hidden, out_pad), lambda i: (0, 0)),   # W2 (resident)
                pl.BlockSpec((1, out_pad), lambda i: (0, 0)),        # b2 (resident)
            ],
            out_specs=pl.BlockSpec((tm, out_pad), lambda i: (i, 0)),
        ),
        compiler_params=pltpu.CompilerParams(
            dimension_semantics=("parallel",),
        ),
        cost_estimate=cost,
    )(x, w1c, b1c, w2c, b2c)

    return out[:N, :sdf_out]


def init_sdfnet_params(key, sdf_in, sdf_out, hidden=128):
    """Deterministic init mimicking nn.Linear default (uniform +/- 1/sqrt(fan_in)).
    Weights stored transposed: (in, out)."""
    k1, k2, k3, k4 = jax.random.split(key, 4)
    lim1 = 1.0 / jnp.sqrt(jnp.float32(sdf_in))
    lim2 = 1.0 / jnp.sqrt(jnp.float32(hidden))
    w1 = jax.random.uniform(k1, (sdf_in, hidden), jnp.float32, -lim1, lim1)
    b1 = jax.random.uniform(k2, (1, hidden), jnp.float32, -lim1, lim1)
    w2 = jax.random.uniform(k3, (hidden, sdf_out), jnp.float32, -lim2, lim2)
    b2 = jax.random.uniform(k4, (1, sdf_out), jnp.float32, -lim2, lim2)
    return w1, b1, w2, b2


def sdfnet_reference(sdf, w1, b1, w2, b2, *, use_bf16=True):
    """Pure-JAX reference with the same operand dtypes as the kernel."""
    mxu_dtype = jnp.bfloat16 if use_bf16 else sdf.dtype
    h = jnp.dot(sdf.astype(mxu_dtype), w1.astype(mxu_dtype),
                preferred_element_type=jnp.float32)
    h = jnp.maximum(h + b1, 0.0)
    o = jnp.dot(h.astype(mxu_dtype), w2.astype(mxu_dtype),
                preferred_element_type=jnp.float32)
    return jnp.maximum(o + b2, 0.0).astype(sdf.dtype)


if __name__ == "__main__":
    # Module-consistent small shapes: config.sdf_in=32, config.sdf_out=64,
    # hidden=128 (fixed by the module), N=256 SDF feature rows.
    N, SDF_IN, SDF_OUT = 256, 32, 64

    key = jax.random.PRNGKey(0)
    k_x, k_p = jax.random.split(key)
    sdf = jax.random.normal(k_x, (N, SDF_IN), jnp.float32)
    w1, b1, w2, b2 = init_sdfnet_params(k_p, SDF_IN, SDF_OUT)

    out = sdfnet_forward(sdf, w1, b1, w2, b2)
    out = jax.block_until_ready(out)

    ref = sdfnet_reference(sdf, w1, b1, w2, b2)
    assert out.shape == (N, SDF_OUT)
    # bf16 MXU operands -> compare against the bf16-operand reference.
    assert jnp.allclose(out, ref, atol=1e-2, rtol=1e-2)

    print("KERNEL_OK")
</pallas_src>

<mosaic_0001>
module attributes {stable_mosaic.version = 11 : i64} {
  func.func @sdfnet_kernel(%arg0: i32, %arg1: memref<128x32xbf16, #tpu.memory_space<vmem>>, %arg2: memref<32x128xbf16, #tpu.memory_space<vmem>>, %arg3: memref<1x128xf32, #tpu.memory_space<vmem>>, %arg4: memref<128x128xbf16, #tpu.memory_space<vmem>>, %arg5: memref<1x128xf32, #tpu.memory_space<vmem>>, %arg6: memref<128x128xf32, #tpu.memory_space<vmem>>) attributes {dimension_semantics = [#tpu.dimension_semantics<parallel>], iteration_bounds = array<i64: 2>, scalar_prefetch = 0 : i64, scratch_operands = 0 : i64, tpu.core_type = #tpu.core_type<tc>, window_params = [{transform_indices = @transform_0, window_bounds = array<i64: 128, 32>}, {pipeline_mode = #tpu.pipeline_mode<synchronous>, transform_indices = @transform_1, window_bounds = array<i64: 32, 128>}, {pipeline_mode = #tpu.pipeline_mode<synchronous>, transform_indices = @transform_2, window_bounds = array<i64: 1, 128>}, {pipeline_mode = #tpu.pipeline_mode<synchronous>, transform_indices = @transform_3, window_bounds = array<i64: 128, 128>}, {pipeline_mode = #tpu.pipeline_mode<synchronous>, transform_indices = @transform_4, window_bounds = array<i64: 1, 128>}, {transform_indices = @transform_5, window_bounds = array<i64: 128, 128>}]} {
    %c0 = arith.constant 0 : index
    %c0_0 = arith.constant 0 : index
    %0 = vector.load %arg1[%c0, %c0_0] : memref<128x32xbf16, #tpu.memory_space<vmem>>, vector<128x32xbf16>
    %c0_1 = arith.constant 0 : index
    %c0_2 = arith.constant 0 : index
    %1 = vector.load %arg2[%c0_1, %c0_2] : memref<32x128xbf16, #tpu.memory_space<vmem>>, vector<32x128xbf16>
    %cst = arith.constant dense<0.000000e+00> : vector<128x128xf32>
    %2 = tpu.matmul %0, %1, %cst {dimension_numbers = #tpu.dot_dimension_numbers<[1], [0], [0], [1], [0, 0, 1, 1], [], []>} : vector<128x32xbf16>, vector<32x128xbf16>, vector<128x128xf32> -> vector<128x128xf32>
    %c0_3 = arith.constant 0 : index
    %c0_4 = arith.constant 0 : index
    %3 = vector.load %arg3[%c0_3, %c0_4] : memref<1x128xf32, #tpu.memory_space<vmem>>, vector<1x128xf32>
    %4 = vector.broadcast %3 : vector<1x128xf32> to vector<128x128xf32>
    %5 = arith.addf %2, %4 : vector<128x128xf32>
    %cst_5 = arith.constant 0.000000e+00 : f32
    %6 = vector.broadcast %cst_5 : f32 to vector<128x128xf32>
    %7 = arith.maximumf %5, %6 : vector<128x128xf32>
    %8 = arith.truncf %7 : vector<128x128xf32> to vector<128x128xbf16>
    %c0_6 = arith.constant 0 : index
    %c0_7 = arith.constant 0 : index
    %9 = vector.load %arg4[%c0_6, %c0_7] : memref<128x128xbf16, #tpu.memory_space<vmem>>, vector<128x128xbf16>
    %cst_8 = arith.constant dense<0.000000e+00> : vector<128x128xf32>
    %10 = tpu.matmul %8, %9, %cst_8 {dimension_numbers = #tpu.dot_dimension_numbers<[1], [0], [0], [1], [0, 0, 1, 1], [], []>} : vector<128x128xbf16>, vector<128x128xbf16>, vector<128x128xf32> -> vector<128x128xf32>
    %c0_9 = arith.constant 0 : index
    %c0_10 = arith.constant 0 : index
    %11 = vector.load %arg5[%c0_9, %c0_10] : memref<1x128xf32, #tpu.memory_space<vmem>>, vector<1x128xf32>
    %12 = vector.broadcast %11 : vector<1x128xf32> to vector<128x128xf32>
    %13 = arith.addf %10, %12 : vector<128x128xf32>
    %cst_11 = arith.constant 0.000000e+00 : f32
    %14 = vector.broadcast %cst_11 : f32 to vector<128x128xf32>
    %15 = arith.maximumf %13, %14 : vector<128x128xf32>
    %c0_12 = arith.constant 0 : index
    %c0_13 = arith.constant 0 : index
    %16 = vector.load %arg6[%c0_12, %c0_13] : memref<128x128xf32, #tpu.memory_space<vmem>>, vector<128x128xf32>
    tpu.vector_store %arg6[%c0_12, %c0_13], %15 {strides = array<i32>} : memref<128x128xf32, #tpu.memory_space<vmem>>, vector<128x128xf32>,
    return
  }
  func.func @transform_0(%arg0: i32) -> (i32, i32) {
    %c0_i32 = arith.constant 0 : i32
    %c0_i32_0 = arith.constant 0 : i32
    return %arg0, %c0_i32 : i32, i32
  }
  func.func @transform_1(%arg0: i32) -> (i32, i32) {
    %c0_i32 = arith.constant 0 : i32
    %c0_i32_0 = arith.constant 0 : i32
    %c0_i32_1 = arith.constant 0 : i32
    return %c0_i32, %c0_i32_0 : i32, i32
  }
  func.func @transform_2(%arg0: i32) -> (i32, i32) {
    %c0_i32 = arith.constant 0 : i32
    %c0_i32_0 = arith.constant 0 : i32
    %c0_i32_1 = arith.constant 0 : i32
    return %c0_i32, %c0_i32_0 : i32, i32
  }
  func.func @transform_3(%arg0: i32) -> (i32, i32) {
    %c0_i32 = arith.constant 0 : i32
    %c0_i32_0 = arith.constant 0 : i32
    %c0_i32_1 = arith.constant 0 : i32
    return %c0_i32, %c0_i32_0 : i32, i32
  }
  func.func @transform_4(%arg0: i32) -> (i32, i32) {
    %c0_i32 = arith.constant 0 : i32
    %c0_i32_0 = arith.constant 0 : i32
    %c0_i32_1 = arith.constant 0 : i32
    return %c0_i32, %c0_i32_0 : i32, i32
  }
  func.func @transform_5(%arg0: i32) -> (i32, i32) {
    %c0_i32 = arith.constant 0 : i32
    %c0_i32_0 = arith.constant 0 : i32
    return %arg0, %c0_i32 : i32, i32
  }
}

</mosaic_0001>

<llo_original>
// kernel: tpu_custom_call.1
$region0: #{tpu_custom_call.1}
  #allocation0 [shape = 'u32[]', space=smem, size = 0x4, offset = 0x4, fixed_abs, tag = 'smem constant byte address 0x4 - core index']
  #allocation1 [shape = 'u32[144,128]{1,0:T(1,128)}', space=vmem, size = 0x12000, scoped, tag = 'internal scratch']
  %s0 = inlined_call_operand.vmem [shape: bf16[256,32], index: 0, kind: input, shape index: {}]
  %s1 = inlined_call_operand.vmem [shape: bf16[32,128], index: 1, kind: input, shape index: {}]
  %s2 = inlined_call_operand.vmem [shape: f32[1,128], index: 2, kind: input, shape index: {}]
  %s3 = inlined_call_operand.vmem [shape: bf16[128,128], index: 3, kind: input, shape index: {}]
  %s4 = inlined_call_operand.vmem [shape: f32[1,128], index: 4, kind: input, shape index: {}]
  %s5 = inlined_call_operand.hbm [shape: f32[256,128], index: 5, kind: output, shape index: {}]
  %s6 = sld [smem:[#allocation0]]
  $region53: #{tpu_custom_call.1} parent=0
    _
  %s8 = ssub.s32 1, %s6
  %s9 = scalar_select 0, %s8, %s6
  $region1: #{tpu_custom_call.1} parent=0
    #allocation2 [shape = 'u8[131072]{0}', space=vmem, size = 0x20000, scoped, tag = 'output window, operand 0']
    #allocation3 [shape = 's32[2]{0}', space=sflag, size = 0x8, scoped, tag = 'scoped memory for tpu_custom_call.1']
    %10 = vsyncpa [#allocation3], 0
    %s11 = scalar_lea.sflag [#allocation3], 1
    %12 = vsyncpa %s11, 0
    loop: start=0, step=1, limit=4
    $region2: #{tpu_custom_call.1} parent=1 // loop_pre_header
      _
    $region3: #{tpu_custom_call.1} parent=1 // loop_header
      %s14 = sphi 0, %s18
      %p15 = scmp.ge.s32.totalorder %s14, 4
      %s24 = sphi 0, %s26
      %s27 = sphi 0, %s24
      %s28 = sphi 0, %s27
      %s44 = sphi 0, %s28
      %s48 = sphi 0, %s48
      %s50 = sphi 0, %s48
      %s51 = sphi 0, %s50
      %s65 = sphi 0, %s51
      %s69 = sphi 0, %s69
      %s71 = sphi 0, %s69
      %s72 = sphi 0, %s71
      %s86 = sphi 0, %s72
      %s90 = sphi 0, %s90
      %s92 = sphi 0, %s90
      %s93 = sphi 0, %s92
      %s107 = sphi 0, %s93
      %s111 = sphi 0, %s111
      %s113 = sphi 0, %s111
      %s114 = sphi 0, %s113
      %s128 = sphi 0, %s114
      %s134 = sphi 0, %s136
      %s137 = sphi 0, %s134
      %s138 = sphi 0, %s137
      %s154 = sphi 0, %s138
    $region4: #{tpu_custom_call.1} parent=1 // loop_header_branch
      %17 = sbr.rel (%p15) target = $region8
    $region5: #{tpu_custom_call.1} parent=1 // loop_body
      %s19 = ssub.s32 %s14, 1
      %s20 = ssub.s32 %s14, 2
      %s21 = sadd.s32 %s14, 1
      %s22 = ssub.s32 %s14, %s21
      %p23 = scmp.eq.s32.totalorder %s22, 0
      %s25 = sadd.s32 %s24, 1
      %s26 = scalar_select %p23, %s24, %s25
      %p29 = pneg %p23
      %p30 = scmp.eq.s32.totalorder %s14, 1
      %p31 = por %p29, %p30
      %p32 = scmp.ne.s32.totalorder %s24, %s27
      %p33 = scmp.eq.s32.totalorder %s14, 0
      %p34 = por %p32, %p33
      %p35 = scmp.ne.s32.totalorder %s24, %s27
      %p36 = scmp.eq.s32.totalorder %s19, 1
      %p37 = por %p35, %p36
      %p38 = scmp.ne.s32.totalorder %s27, %s28
      %p39 = scmp.eq.s32.totalorder %s19, 0
      %p40 = por %p38, %p39
      %p41 = scmp.ne.s32.totalorder %s27, %s28
      %p42 = scmp.eq.s32.totalorder %s20, 1
      %p43 = por %p41, %p42
      %p45 = scmp.ne.s32.totalorder %s28, %s44
      %p46 = scmp.eq.s32.totalorder %s20, 0
      %p47 = por %p45, %p46
      %s49 = sadd.s32 %s48, 1
      %p52 = scmp.eq.s32.totalorder %s14, 1
      %p53 = scmp.ne.s32.totalorder %s48, %s50
      %p54 = scmp.eq.s32.totalorder %s14, 0
      %p55 = por %p53, %p54
      %p56 = scmp.ne.s32.totalorder %s48, %s50
      %p57 = scmp.eq.s32.totalorder %s19, 1
      %p58 = por %p56, %p57
      %p59 = scmp.ne.s32.totalorder %s50, %s51
      %p60 = scmp.eq.s32.totalorder %s19, 0
      %p61 = por %p59, %p60
      %p62 = scmp.ne.s32.totalorder %s50, %s51
      %p63 = scmp.eq.s32.totalorder %s20, 1
      %p64 = por %p62, %p63
      %p66 = scmp.ne.s32.totalorder %s51, %s65
      %p67 = scmp.eq.s32.totalorder %s20, 0
      %p68 = por %p66, %p67
      %s70 = sadd.s32 %s69, 1
      %p73 = scmp.eq.s32.totalorder %s14, 1
      %p74 = scmp.ne.s32.totalorder %s69, %s71
      %p75 = scmp.eq.s32.totalorder %s14, 0
      %p76 = por %p74, %p75
      %p77 = scmp.ne.s32.totalorder %s69, %s71
      %p78 = scmp.eq.s32.totalorder %s19, 1
      %p79 = por %p77, %p78
      %p80 = scmp.ne.s32.totalorder %s71, %s72
      %p81 = scmp.eq.s32.totalorder %s19, 0
      %p82 = por %p80, %p81
      %p83 = scmp.ne.s32.totalorder %s71, %s72
      %p84 = scmp.eq.s32.totalorder %s20, 1
      %p85 = por %p83, %p84
      %p87 = scmp.ne.s32.totalorder %s72, %s86
      %p88 = scmp.eq.s32.totalorder %s20, 0
      %p89 = por %p87, %p88
      %s91 = sadd.s32 %s90, 1
      %p94 = scmp.eq.s32.totalorder %s14, 1
      %p95 = scmp.ne.s32.totalorder %s90, %s92
      %p96 = scmp.eq.s32.totalorder %s14, 0
      %p97 = por %p95, %p96
      %p98 = scmp.ne.s32.totalorder %s90, %s92
      %p99 = scmp.eq.s32.totalorder %s19, 1
      %p100 = por %p98, %p99
      %p101 = scmp.ne.s32.totalorder %s92, %s93
      %p102 = scmp.eq.s32.totalorder %s19, 0
      %p103 = por %p101, %p102
      %p104 = scmp.ne.s32.totalorder %s92, %s93
      %p105 = scmp.eq.s32.totalorder %s20, 1
      %p106 = por %p104, %p105
      %p108 = scmp.ne.s32.totalorder %s93, %s107
      %p109 = scmp.eq.s32.totalorder %s20, 0
      %p110 = por %p108, %p109
      %s112 = sadd.s32 %s111, 1
      %p115 = scmp.eq.s32.totalorder %s14, 1
      %p116 = scmp.ne.s32.totalorder %s111, %s113
      %p117 = scmp.eq.s32.totalorder %s14, 0
      %p118 = por %p116, %p117
      %p119 = scmp.ne.s32.totalorder %s111, %s113
      %p120 = scmp.eq.s32.totalorder %s19, 1
      %p121 = por %p119, %p120
      %p122 = scmp.ne.s32.totalorder %s113, %s114
      %p123 = scmp.eq.s32.totalorder %s19, 0
      %p124 = por %p122, %p123
      %p125 = scmp.ne.s32.totalorder %s113, %s114
      %p126 = scmp.eq.s32.totalorder %s20, 1
      %p127 = por %p125, %p126
      %p129 = scmp.ne.s32.totalorder %s114, %s128
      %p130 = scmp.eq.s32.totalorder %s20, 0
      %p131 = por %p129, %p130
      %s132 = ssub.s32 %s14, %s21
      %p133 = scmp.eq.s32.totalorder %s132, 0
      %s135 = sadd.s32 %s134, 1
      %s136 = scalar_select %p133, %s134, %s135
      %p139 = pneg %p133
      %p140 = scmp.eq.s32.totalorder %s14, 1
      %p141 = por %p139, %p140
      %p142 = scmp.ne.s32.totalorder %s134, %s137
      %p143 = scmp.eq.s32.totalorder %s14, 0
      %p144 = por %p142, %p143
      %p145 = scmp.ne.s32.totalorder %s134, %s137
      %p146 = scmp.eq.s32.totalorder %s19, 1
      %p147 = por %p145, %p146
      %p148 = scmp.ne.s32.totalorder %s137, %s138
      %p149 = scmp.eq.s32.totalorder %s19, 0
      %p150 = por %p148, %p149
      %p151 = scmp.ne.s32.totalorder %s137, %s138
      %p152 = scmp.eq.s32.totalorder %s20, 1
      %p153 = por %p151, %p152
      %p155 = scmp.ne.s32.totalorder %s138, %s154
      %p156 = scmp.eq.s32.totalorder %s20, 0
      %p157 = por %p155, %p156
      %p158 = scmp.le.s32.totalorder 1, %s14
      %p159 = scmp.lt.s32.totalorder %s14, 3
      %p160 = pnand %p158, %p159
      %p161 = pneg %p160
      // Predicated region
      $region9: #{tpu_custom_call.1} parent=5 // pred_check
        _
      $region10: #{tpu_custom_call.1} parent=5 // pred_check_branch
        %163 = sbr.rel (%p160) target = $region12
      $region11: #{tpu_custom_call.1} parent=5 // pred_region
        %s164 = ssub.s32 %s14, 1
        // Predicated region
        $region13: #{tpu_custom_call.1} parent=11 // pred_check
          %p165 = pneg %p61
        $region14: #{tpu_custom_call.1} parent=11 // pred_check_branch
          %167 = sbr.rel (%p165) target = $region16
        $region15: #{tpu_custom_call.1} parent=11 // pred_region
          _
        $region16: #{tpu_custom_call.1} parent=11 // pred_fallthru
          _
        // Predicated region
        $region17: #{tpu_custom_call.1} parent=11 // pred_check
          %p168 = pneg %p82
        $region18: #{tpu_custom_call.1} parent=11 // pred_check_branch
          %170 = sbr.rel (%p168) target = $region20
        $region19: #{tpu_custom_call.1} parent=11 // pred_region
          _
        $region20: #{tpu_custom_call.1} parent=11 // pred_fallthru
          _
        // Predicated region
        $region21: #{tpu_custom_call.1} parent=11 // pred_check
          %p171 = pneg %p103
        $region22: #{tpu_custom_call.1} parent=11 // pred_check_branch
          %173 = sbr.rel (%p171) target = $region24
        $region23: #{tpu_custom_call.1} parent=11 // pred_region
          _
        $region24: #{tpu_custom_call.1} parent=11 // pred_fallthru
          _
        // Predicated region
        $region25: #{tpu_custom_call.1} parent=11 // pred_check
          %p174 = pneg %p124
        $region26: #{tpu_custom_call.1} parent=11 // pred_check_branch
          %176 = sbr.rel (%p174) target = $region28
        $region27: #{tpu_custom_call.1} parent=11 // pred_region
          _
        $region28: #{tpu_custom_call.1} parent=11 // pred_fallthru
          _
      $region12: #{tpu_custom_call.1} parent=5 // pred_fallthru
        _
      %p177 = scmp.lt.s32.totalorder %s14, 2
      // Predicated region
      $region29: #{tpu_custom_call.1} parent=5 // pred_check
        %p178 = pneg %p177
      $region30: #{tpu_custom_call.1} parent=5 // pred_check_branch
        %180 = sbr.rel (%p178) target = $region32
      $region31: #{tpu_custom_call.1} parent=5 // pred_region
        // Predicated region
        $region33: #{tpu_custom_call.1} parent=31 // pred_check
          %p181 = pneg %p34
        $region34: #{tpu_custom_call.1} parent=31 // pred_check_branch
          %183 = sbr.rel (%p181) target = $region36
        $region35: #{tpu_custom_call.1} parent=31 // pred_region
          %s184 = smul.u32 16, %s14
          %p185 = scmp.lt.s32.totalorder %s184, 31
          %s186 = scalar_select %p185, %s184, 31
          %s187 = smul.addr %s186, 4
          %s188 = scalar_lea.vmem %s0, %s187
          %s189 = smul.u32 16, %s14
        $region36: #{tpu_custom_call.1} parent=31 // pred_fallthru
          _
      $region32: #{tpu_custom_call.1} parent=5 // pred_fallthru
        _
      %p190 = scmp.le.s32.totalorder 1, %s14
      %p191 = scmp.lt.s32.totalorder %s14, 3
      %p192 = pnand %p190, %p191
      %p193 = pneg %p192
      // Predicated region
      $region37: #{tpu_custom_call.1} parent=5 // pred_check
        _
      $region38: #{tpu_custom_call.1} parent=5 // pred_check_branch
        %195 = sbr.rel (%p192) target = $region40
      $region39: #{tpu_custom_call.1} parent=5 // pred_region
        %s196 = ssub.s32 %s14, 1
        %s197 = smul.u32 16, %s19
        %p198 = scmp.lt.s32.totalorder %s197, 31
        %s199 = scalar_select %p198, %s197, 31
        %s200 = smul.addr %s199, 4
        %s201 = scalar_lea.vmem %s0, %s200
        %p202 = pneg %p40
        %p203 = pneg %p37
        %p204 = pneg %p61
        %p205 = pneg %p58
        %p206 = pneg %p82
        %p207 = pneg %p79
        %p208 = pneg %p103
        %p209 = pneg %p100
        %p210 = pneg %p124
        %p211 = pneg %p121
        %p212 = pneg %p150
        %p213 = pneg %p147
        %s214 = sand.u32 %s137, 1
        %s215 = scalar_lea.sflag [#allocation3], %s214
        %s216 = sand.u32 %s137, 1
        %s217 = smul.addr %s216, 128
        %s218 = scalar_lea.vmem [#allocation2], %s217
        %s219 = smul.u32 16, %s19
        %p220 = scmp.lt.s32.totalorder %s219, 31
        %s221 = scalar_select %p220, %s219, 31
        %s222 = smul.addr %s221, 4
        %s223 = scalar_lea.vmem %s0, %s222
        %s224 = smul.u32 16, %s19
        %s225 = smul.u32 16, %s19
        %v227 = vld [vmem:[%s223] sm:$0xf]
        %v228 = vld [vmem:[%s223 + $0x4] sm:$0xf]
        %v229 = vld [vmem:[%s223 + $0x8] sm:$0xf]
        %v230 = vld [vmem:[%s223 + $0xc] sm:$0xf]
        %v231 = vld [vmem:[%s223 + $0x10] sm:$0xf]
        %v232 = vld [vmem:[%s223 + $0x14] sm:$0xf]
        %v233 = vld [vmem:[%s223 + $0x18] sm:$0xf]
        %v234 = vld [vmem:[%s223 + $0x1c] sm:$0xf]
        %v235 = vld [vmem:[%s223 + $0x20] sm:$0xf]
        %v236 = vld [vmem:[%s223 + $0x24] sm:$0xf]
        %v237 = vld [vmem:[%s223 + $0x28] sm:$0xf]
        %v238 = vld [vmem:[%s223 + $0x2c] sm:$0xf]
        %v239 = vld [vmem:[%s223 + $0x30] sm:$0xf]
        %v240 = vld [vmem:[%s223 + $0x34] sm:$0xf]
        %v241 = vld [vmem:[%s223 + $0x38] sm:$0xf]
        %v242 = vld [vmem:[%s223 + $0x3c] sm:$0xf]
        %v243 = vld [vmem:[%s1] sm:$0xf]
        %v244 = vld [vmem:[%s1 + $0x4] sm:$0xf]
        %v245 = vld [vmem:[%s1 + $0x8] sm:$0xf]
        %v246 = vld [vmem:[%s1 + $0xc] sm:$0xf]
        %v247 = vld [vmem:[%s2] sm:$0x1]
        %v249 = vlaneseq
        %v250 = vshrl.u32 %v249, 7
        %v251 = vsub.s32 0, %v250
        %v252 = vrot.slane %v247, %v251
        %v270 = vunpack.c.l.b16 %v227
        %v271 = vunpack.c.l.b16 %v228
        %v272 = vunpack.c.l.b16 %v229
        %v273 = vunpack.c.l.b16 %v230
        %v274 = vunpack.c.l.b16 %v231
        %v275 = vunpack.c.l.b16 %v232
        %v276 = vunpack.c.l.b16 %v233
        %v277 = vunpack.c.l.b16 %v234
        %v278 = vunpack.c.l.b16 %v235
        %v279 = vunpack.c.l.b16 %v236
        %v280 = vunpack.c.l.b16 %v237
        %v281 = vunpack.c.l.b16 %v238
        %v282 = vunpack.c.l.b16 %v239
        %v283 = vunpack.c.l.b16 %v240
        %v284 = vunpack.c.l.b16 %v241
        %v285 = vunpack.c.l.b16 %v242
        %v286 = vpack.c.b16 %v271, %v270
        %v287 = vpack.c.b16 %v273, %v272
        %v288 = vpack.c.b16 %v275, %v274
        %v289 = vpack.c.b16 %v277, %v276
        %v290 = vpack.c.b16 %v279, %v278
        %v291 = vpack.c.b16 %v281, %v280
        %v292 = vpack.c.b16 %v283, %v282
        %v293 = vpack.c.b16 %v285, %v284
        %v298 = vunpack.c.l.b16 %v243
        %v299 = vunpack.c.l.b16 %v244
        %v300 = vunpack.c.l.b16 %v245
        %v301 = vunpack.c.l.b16 %v246
        %v302 = vpack.c.b16 %v299, %v298
        %v303 = vpack.c.b16 %v301, %v300
        %vm306 = vcmask 261120
        %v308 = vsel %vm306, %v286, 0
        %v311 = vsel %vm306, %v287, 0
        %v314 = vsel %vm306, %v288, 0
        %v317 = vsel %vm306, %v289, 0
        %v320 = vsel %vm306, %v290, 0
        %v323 = vsel %vm306, %v291, 0
        %v326 = vsel %vm306, %v292, 0
        %v329 = vsel %vm306, %v293, 0
        %331 = vmatprep.subr.bf16.mxu0 0
        %332 = vmatpush1.bf16.msra.mxu0 %v302
        %333 = vmatprep.subr.bf16.mxu0 0
        %334 = vmatpush1.bf16.msra.mxu0 %v303
        %335 = vmatprep.subr.bf16.mxu0 0
        %336 = vmatpush1.bf16.msra.mxu0 0
        %337 = vmatprep.subr.bf16.mxu0 0
        %338 = vmatpush1.bf16.msra.mxu0 0
        %339 = vmatprep.subr.bf16.mxu0 0
        %340 = vmatpush1.bf16.msra.mxu0 0
        %341 = vmatprep.subr.bf16.mxu0 0
        %342 = vmatpush1.bf16.msra.mxu0 0
        %343 = vmatprep.subr.bf16.mxu0 0
        %344 = vmatpush1.bf16.msra.mxu0 0
        %345 = vmatprep.subr.bf16.mxu0 0
        %346 = vmatpush1.bf16.msra.mxu0 0
        %347 = vmatprep.subr.bf16.mxu0 0
        %348 = vmatpush1.bf16.msra.mxu0 0
        %349 = vmatprep.subr.bf16.mxu0 0
        %350 = vmatpush1.bf16.msra.mxu0 0
        %351 = vmatprep.subr.bf16.mxu0 0
        %352 = vmatpush1.bf16.msra.mxu0 0
        %353 = vmatprep.subr.bf16.mxu0 0
        %354 = vmatpush1.bf16.msra.mxu0 0
        %355 = vmatprep.subr.bf16.mxu0 0
        %356 = vmatpush1.bf16.msra.mxu0 0
        %357 = vmatprep.subr.bf16.mxu0 0
        %358 = vmatpush1.bf16.msra.mxu0 0
        %359 = vmatprep.subr.bf16.mxu0 0
        %360 = vmatpush1.bf16.msra.mxu0 0
        %361 = vmatprep.subr.bf16.mxu0 0
        %362 = vmatpush1.bf16.msra.mxu0 0
        %363 = vmatprep.mubr.bf16.mxu0 0
        %364 = vmatmul.mubr.bf16.gmra.mrb[0].mxu0 %v308
        %v365 = vpop.f32.mrb[0].mxu0
        %v366 = vadd.f32 %v252, %v365
        %v367 = vpop.f32.mrb[0].mxu0
        %v368 = vpop.f32.mrb[0].mxu0
        %v369 = vadd.f32 %v252, %v368
        %v370 = vpop.f32.mrb[0].mxu0
        %371 = vmatprep.mubr.bf16.mxu0 0
        %372 = vmatmul.mubr.bf16.gmra.mrb[0].mxu0 %v311
        %v373 = vpop.f32.mrb[0].mxu0
        %v374 = vadd.f32 %v252, %v373
        %v375 = vpop.f32.mrb[0].mxu0
        %v376 = vpop.f32.mrb[0].mxu0
        %v377 = vadd.f32 %v252, %v376
        %v378 = vpop.f32.mrb[0].mxu0
        %379 = vmatprep.mubr.bf16.mxu0 0
        %380 = vmatmul.mubr.bf16.gmra.mrb[0].mxu0 %v314
        %v381 = vpop.f32.mrb[0].mxu0
        %v382 = vadd.f32 %v252, %v381
        %v383 = vpop.f32.mrb[0].mxu0
        %v384 = vpop.f32.mrb[0].mxu0
        %v385 = vadd.f32 %v252, %v384
        %v386 = vpop.f32.mrb[0].mxu0
        %387 = vmatprep.mubr.bf16.mxu0 0
        %388 = vmatmul.mubr.bf16.gmra.mrb[0].mxu0 %v317
        %v389 = vpop.f32.mrb[0].mxu0
        %v390 = vadd.f32 %v252, %v389
        %v391 = vpop.f32.mrb[0].mxu0
        %v392 = vpop.f32.mrb[0].mxu0
        %v393 = vadd.f32 %v252, %v392
        %v394 = vpop.f32.mrb[0].mxu0
        %395 = vmatprep.mubr.bf16.mxu0 0
        %396 = vmatmul.mubr.bf16.gmra.mrb[0].mxu0 %v320
        %v397 = vpop.f32.mrb[0].mxu0
        %v398 = vadd.f32 %v252, %v397
        %v399 = vpop.f32.mrb[0].mxu0
        %v400 = vpop.f32.mrb[0].mxu0
        %v401 = vadd.f32 %v252, %v400
        %v402 = vpop.f32.mrb[0].mxu0
        %403 = vmatprep.mubr.bf16.mxu0 0
        %404 = vmatmul.mubr.bf16.gmra.mrb[0].mxu0 %v323
        %v405 = vpop.f32.mrb[0].mxu0
        %v406 = vadd.f32 %v252, %v405
        %v407 = vpop.f32.mrb[0].mxu0
        %v408 = vpop.f32.mrb[0].mxu0
        %v409 = vadd.f32 %v252, %v408
        %v410 = vpop.f32.mrb[0].mxu0
        %411 = vmatprep.mubr.bf16.mxu0 0
        %412 = vmatmul.mubr.bf16.gmra.mrb[0].mxu0 %v326
        %v413 = vpop.f32.mrb[0].mxu0
        %v414 = vadd.f32 %v252, %v413
        %v415 = vpop.f32.mrb[0].mxu0
        %v416 = vpop.f32.mrb[0].mxu0
        %v417 = vadd.f32 %v252, %v416
        %v418 = vpop.f32.mrb[0].mxu0
        %419 = vmatprep.mubr.bf16.mxu0 0
        %420 = vmatmul.mubr.bf16.gmra.mrb[0].mxu0 %v329
        %v421 = vpop.f32.mrb[0].mxu0
        %v422 = vadd.f32 %v252, %v421
        %v423 = vpop.f32.mrb[0].mxu0
        %v424 = vpop.f32.mrb[0].mxu0
        %v425 = vadd.f32 %v252, %v424
        %v426 = vpop.f32.mrb[0].mxu0
        %427 = vdwg.mxu0
        %v428 = vmax.f32 %v366, 0.0
        %v429 = vmax.f32 %v369, 0.0
        %v430 = vmax.f32 %v374, 0.0
        %v431 = vmax.f32 %v377, 0.0
        %v432 = vmax.f32 %v382, 0.0
        %v433 = vmax.f32 %v385, 0.0
        %v434 = vmax.f32 %v390, 0.0
        %v435 = vmax.f32 %v393, 0.0
        %v436 = vmax.f32 %v398, 0.0
        %v437 = vmax.f32 %v401, 0.0
        %v438 = vmax.f32 %v406, 0.0
        %v439 = vmax.f32 %v409, 0.0
        %v440 = vmax.f32 %v414, 0.0
        %v441 = vmax.f32 %v417, 0.0
        %v442 = vmax.f32 %v422, 0.0
        %v443 = vmax.f32 %v425, 0.0
        %v444 = vpack.c.bf16 %v429, %v428
        %v445 = vpack.c.bf16 %v431, %v430
        %v446 = vpack.c.bf16 %v433, %v432
        %v447 = vpack.c.bf16 %v435, %v434
        %v448 = vpack.c.bf16 %v437, %v436
        %v449 = vpack.c.bf16 %v439, %v438
        %v450 = vpack.c.bf16 %v441, %v440
        %v451 = vpack.c.bf16 %v443, %v442
        %v452 = vld [vmem:[%s3] sm:$0xf]
        %v453 = vld [vmem:[%s3 + $0x4] sm:$0xf]
        %v454 = vld [vmem:[%s3 + $0x8] sm:$0xf]
        %v455 = vld [vmem:[%s3 + $0xc] sm:$0xf]
        %v456 = vld [vmem:[%s3 + $0x10] sm:$0xf]
        %v457 = vld [vmem:[%s3 + $0x14] sm:$0xf]
        %v458 = vld [vmem:[%s3 + $0x18] sm:$0xf]
        %v459 = vld [vmem:[%s3 + $0x1c] sm:$0xf]
        %v460 = vld [vmem:[%s3 + $0x20] sm:$0xf]
        %v461 = vld [vmem:[%s3 + $0x24] sm:$0xf]
        %v462 = vld [vmem:[%s3 + $0x28] sm:$0xf]
        %v463 = vld [vmem:[%s3 + $0x2c] sm:$0xf]
        %v464 = vld [vmem:[%s3 + $0x30] sm:$0xf]
        %v465 = vld [vmem:[%s3 + $0x34] sm:$0xf]
        %v466 = vld [vmem:[%s3 + $0x38] sm:$0xf]
        %v467 = vld [vmem:[%s3 + $0x3c] sm:$0xf]
        %v468 = vld [vmem:[%s4] sm:$0x1]
        %v470 = vlaneseq
        %v471 = vshrl.u32 %v470, 7
        %v472 = vsub.s32 0, %v471
        %v473 = vrot.slane %v468, %v472
        %v491 = vunpack.c.l.b16 %v452
        %v492 = vunpack.c.l.b16 %v453
        %v493 = vunpack.c.l.b16 %v454
        %v494 = vunpack.c.l.b16 %v455
        %v495 = vunpack.c.l.b16 %v456
        %v496 = vunpack.c.l.b16 %v457
        %v497 = vunpack.c.l.b16 %v458
        %v498 = vunpack.c.l.b16 %v459
        %v499 = vunpack.c.l.b16 %v460
        %v500 = vunpack.c.l.b16 %v461
        %v501 = vunpack.c.l.b16 %v462
        %v502 = vunpack.c.l.b16 %v463
        %v503 = vunpack.c.l.b16 %v464
        %v504 = vunpack.c.l.b16 %v465
        %v505 = vunpack.c.l.b16 %v466
        %v506 = vunpack.c.l.b16 %v467
        %v507 = vpack.c.b16 %v492, %v491
        %v508 = vpack.c.b16 %v494, %v493
        %v509 = vpack.c.b16 %v496, %v495
        %v510 = vpack.c.b16 %v498, %v497
        %v511 = vpack.c.b16 %v500, %v499
        %v512 = vpack.c.b16 %v502, %v501
        %v513 = vpack.c.b16 %v504, %v503
        %v514 = vpack.c.b16 %v506, %v505
        %523 = vmatprep.subr.bf16.mxu0 0
        %524 = vmatpush1.bf16.msra.mxu0 %v507
        %525 = vmatprep.subr.bf16.mxu0 0
        %526 = vmatpush1.bf16.msra.mxu0 %v508
        %527 = vmatprep.subr.bf16.mxu0 0
        %528 = vmatpush1.bf16.msra.mxu0 %v509
        %529 = vmatprep.subr.bf16.mxu0 0
        %530 = vmatpush1.bf16.msra.mxu0 %v510
        %531 = vmatprep.subr.bf16.mxu0 0
        %532 = vmatpush1.bf16.msra.mxu0 %v511
        %533 = vmatprep.subr.bf16.mxu0 0
        %534 = vmatpush1.bf16.msra.mxu0 %v512
        %535 = vmatprep.subr.bf16.mxu0 0
        %536 = vmatpush1.bf16.msra.mxu0 %v513
        %537 = vmatprep.subr.bf16.mxu0 0
        %538 = vmatpush1.bf16.msra.mxu0 %v514
        %539 = vmatprep.subr.bf16.mxu0 0
        %540 = vmatpush1.bf16.msra.mxu0 0
        %541 = vmatprep.subr.bf16.mxu0 0
        %542 = vmatpush1.bf16.msra.mxu0 0
        %543 = vmatprep.subr.bf16.mxu0 0
        %544 = vmatpush1.bf16.msra.mxu0 0
        %545 = vmatprep.subr.bf16.mxu0 0
        %546 = vmatpush1.bf16.msra.mxu0 0
        %547 = vmatprep.subr.bf16.mxu0 0
        %548 = vmatpush1.bf16.msra.mxu0 0
        %549 = vmatprep.subr.bf16.mxu0 0
        %550 = vmatpush1.bf16.msra.mxu0 0
        %551 = vmatprep.subr.bf16.mxu0 0
        %552 = vmatpush1.bf16.msra.mxu0 0
        %553 = vmatprep.subr.bf16.mxu0 0
        %554 = vmatpush1.bf16.msra.mxu0 0
        %555 = vmatprep.mubr.bf16.mxu0 0
        %556 = vmatmul.mubr.bf16.gmra.mrb[0].mxu0 %v444
        %v557 = vpop.f32.mrb[0].mxu0
        %v558 = vadd.f32 %v473, %v557
        %v559 = vpop.f32.mrb[0].mxu0
        %v560 = vpop.f32.mrb[0].mxu0
        %v561 = vadd.f32 %v473, %v560
        %v562 = vpop.f32.mrb[0].mxu0
        %563 = vmatprep.mubr.bf16.mxu0 0
        %564 = vmatmul.mubr.bf16.gmra.mrb[0].mxu0 %v445
        %v565 = vpop.f32.mrb[0].mxu0
        %v566 = vadd.f32 %v473, %v565
        %v567 = vpop.f32.mrb[0].mxu0
        %v568 = vpop.f32.mrb[0].mxu0
        %v569 = vadd.f32 %v473, %v568
        %v570 = vpop.f32.mrb[0].mxu0
        %571 = vmatprep.mubr.bf16.mxu0 0
        %572 = vmatmul.mubr.bf16.gmra.mrb[0].mxu0 %v446
        %v573 = vpop.f32.mrb[0].mxu0
        %v574 = vadd.f32 %v473, %v573
        %v575 = vpop.f32.mrb[0].mxu0
        %v576 = vpop.f32.mrb[0].mxu0
        %v577 = vadd.f32 %v473, %v576
        %v578 = vpop.f32.mrb[0].mxu0
        %579 = vmatprep.mubr.bf16.mxu0 0
        %580 = vmatmul.mubr.bf16.gmra.mrb[0].mxu0 %v447
        %v581 = vpop.f32.mrb[0].mxu0
        %v582 = vadd.f32 %v473, %v581
        %v583 = vpop.f32.mrb[0].mxu0
        %v584 = vpop.f32.mrb[0].mxu0
        %v585 = vadd.f32 %v473, %v584
        %v586 = vpop.f32.mrb[0].mxu0
        %587 = vmatprep.mubr.bf16.mxu0 0
        %588 = vmatmul.mubr.bf16.gmra.mrb[0].mxu0 %v448
        %v589 = vpop.f32.mrb[0].mxu0
        %v590 = vadd.f32 %v473, %v589
        %v591 = vpop.f32.mrb[0].mxu0
        %v592 = vpop.f32.mrb[0].mxu0
        %v593 = vadd.f32 %v473, %v592
        %v594 = vpop.f32.mrb[0].mxu0
        %595 = vmatprep.mubr.bf16.mxu0 0
        %596 = vmatmul.mubr.bf16.gmra.mrb[0].mxu0 %v449
        %v597 = vpop.f32.mrb[0].mxu0
        %v598 = vadd.f32 %v473, %v597
        %v599 = vpop.f32.mrb[0].mxu0
        %v600 = vpop.f32.mrb[0].mxu0
        %v601 = vadd.f32 %v473, %v600
        %v602 = vpop.f32.mrb[0].mxu0
        %603 = vmatprep.mubr.bf16.mxu0 0
        %604 = vmatmul.mubr.bf16.gmra.mrb[0].mxu0 %v450
        %v605 = vpop.f32.mrb[0].mxu0
        %v606 = vadd.f32 %v473, %v605
        %v607 = vpop.f32.mrb[0].mxu0
        %v608 = vpop.f32.mrb[0].mxu0
        %v609 = vadd.f32 %v473, %v608
        %v610 = vpop.f32.mrb[0].mxu0
        %611 = vmatprep.mubr.bf16.mxu0 0
        %612 = vmatmul.mubr.bf16.gmra.mrb[0].mxu0 %v451
        %v613 = vpop.f32.mrb[0].mxu0
        %v614 = vadd.f32 %v473, %v613
        %v615 = vpop.f32.mrb[0].mxu0
        %v616 = vpop.f32.mrb[0].mxu0
        %v617 = vadd.f32 %v473, %v616
        %v618 = vpop.f32.mrb[0].mxu0
        %619 = vdwg.mxu0
        %v620 = vmax.f32 %v558, 0.0
        %v621 = vmax.f32 %v561, 0.0
        %v622 = vmax.f32 %v566, 0.0
        %v623 = vmax.f32 %v569, 0.0
        %v624 = vmax.f32 %v574, 0.0
        %v625 = vmax.f32 %v577, 0.0
        %v626 = vmax.f32 %v582, 0.0
        %v627 = vmax.f32 %v585, 0.0
        %v628 = vmax.f32 %v590, 0.0
        %v629 = vmax.f32 %v593, 0.0
        %v630 = vmax.f32 %v598, 0.0
        %v631 = vmax.f32 %v601, 0.0
        %v632 = vmax.f32 %v606, 0.0
        %v633 = vmax.f32 %v609, 0.0
        %v634 = vmax.f32 %v614, 0.0
        %v635 = vmax.f32 %v617, 0.0
        %636 = vst [vmem:[%s218] sm:$0xff] %v620
        %637 = vst [vmem:[%s218 + $0x8] sm:$0xff] %v621
        %638 = vst [vmem:[%s218 + $0x10] sm:$0xff] %v622
        %639 = vst [vmem:[%s218 + $0x18] sm:$0xff] %v623
        %640 = vst [vmem:[%s218 + $0x20] sm:$0xff] %v624
        %641 = vst [vmem:[%s218 + $0x28] sm:$0xff] %v625
        %642 = vst [vmem:[%s218 + $0x30] sm:$0xff] %v626
        %643 = vst [vmem:[%s218 + $0x38] sm:$0xff] %v627
        %644 = vst [vmem:[%s218 + $0x40] sm:$0xff] %v628
        %645 = vst [vmem:[%s218 + $0x48] sm:$0xff] %v629
        %646 = vst [vmem:[%s218 + $0x50] sm:$0xff] %v630
        %647 = vst [vmem:[%s218 + $0x58] sm:$0xff] %v631
        %648 = vst [vmem:[%s218 + $0x60] sm:$0xff] %v632
        %649 = vst [vmem:[%s218 + $0x68] sm:$0xff] %v633
        %650 = vst [vmem:[%s218 + $0x70] sm:$0xff] %v634
        %651 = vst [vmem:[%s218 + $0x78] sm:$0xff] %v635
        %s652 = sand.u32 %s137, 1
        %s653 = scalar_lea.sflag [#allocation3], %s652
        %s654 = sand.u32 %s137, 1
        %s655 = smul.addr %s654, 128
        %s656 = scalar_lea.vmem [#allocation2], %s655
        // Predicated region
        $region41: #{tpu_custom_call.1} parent=39 // pred_check
          %p657 = pneg %p147
        $region42: #{tpu_custom_call.1} parent=39 // pred_check_branch
          %659 = sbr.rel (%p657) target = $region44
        $region43: #{tpu_custom_call.1} parent=39 // pred_region
          %s660 = smul.u32 16, %s19
          %s662 = ssub.s32 2048, 2048
          %663 = vsyncadd %s653, %s662
          %s664 = smul.addr %s660, 128
          %s665 = scalar_lea.hbm %s5, %s664
          %s666 = sshll.u32 %s656, 4
          %s667 = int_to_ptr.vmem [resolvable:$true] %s666
          %672 = dma.vmem_to_hbm [thread:$0]  %s667, 2048, %s665, %s653, 128, 128, 8
        $region44: #{tpu_custom_call.1} parent=39 // pred_fallthru
          _
      $region40: #{tpu_custom_call.1} parent=5 // pred_fallthru
        _
      %p673 = scmp.le.s32.totalorder 2, %s14
      // Predicated region
      $region45: #{tpu_custom_call.1} parent=5 // pred_check
        %p674 = pneg %p673
      $region46: #{tpu_custom_call.1} parent=5 // pred_check_branch
        %676 = sbr.rel (%p674) target = $region48
      $region47: #{tpu_custom_call.1} parent=5 // pred_region
        %s677 = ssub.s32 %s14, 2
        // Predicated region
        $region49: #{tpu_custom_call.1} parent=47 // pred_check
          %p678 = pneg %p153
        $region50: #{tpu_custom_call.1} parent=47 // pred_check_branch
          %680 = sbr.rel (%p678) target = $region52
        $region51: #{tpu_custom_call.1} parent=47 // pred_region
          %s681 = sand.u32 %s138, 1
          %s682 = scalar_lea.sflag [#allocation3], %s681
          %s683 = sand.u32 %s138, 1
          %s684 = smul.addr %s683, 128
          %s685 = scalar_lea.vmem [#allocation2], %s684
          %686 = dma.done %s682, 2048
        $region52: #{tpu_custom_call.1} parent=47 // pred_fallthru
          _
      $region48: #{tpu_custom_call.1} parent=5 // pred_fallthru
        _
    $region6: #{tpu_custom_call.1} parent=1 // loop_footer
      %s18 = sadd.s32 1, %s14
    $region7: #{tpu_custom_call.1} parent=1 // loop_footer_branch
      %13 = sbr.rel target = $region3
    $region8: #{tpu_custom_call.1} parent=1 // loop_exit
      _
    %687 = vsyncpa [#allocation3], 1
    %s688 = scalar_lea.sflag [#allocation3], 1
    %689 = vsyncpa %s688, 1

</llo_original>
